<compile_context>
chip_gen: v7x
topology: tpu7x:2x2x1
jax: 0.10.0
libtpu: 0.0.40
codegen_flags: <defaults>
</compile_context>

<pallas_src>
import math

import jax
import jax.numpy as jnp
from jax.experimental import pallas as pl
from jax.experimental.pallas import tpu as pltpu


def _ffn_kernel(x_ref, w1_ref, b1_ref, w2_ref, b2_ref, o_ref, acc_ref):
    """One (row-tile i, hidden-tile k) step of FFN2(relu(FFN1(x)))."""
    k = pl.program_id(1)

    @pl.when(k == 0)
    def _():
        acc_ref[...] = jnp.zeros_like(acc_ref)

    # (tm, d_in) @ (d_in, th) -> f32 (tm, th) on the MXU.
    h = jnp.dot(x_ref[...], w1_ref[...], preferred_element_type=jnp.float32)
    # Bias + ReLU on the f32 accumulator (VPU). Per-hidden-column, so this
    # commutes with the hidden tiling.
    h = jnp.maximum(h + b1_ref[...], 0.0)
    # (tm, th) @ (th, d_out) -> accumulate into f32 VMEM scratch.
    acc_ref[...] += jnp.dot(h.astype(w2_ref.dtype), w2_ref[...],
                            preferred_element_type=jnp.float32)

    @pl.when(k == pl.num_programs(1) - 1)
    def _():
        o_ref[...] = (acc_ref[...] + b2_ref[...]).astype(o_ref.dtype)


def prepare_ffn_params(w1, b1, w2, b2, *, compute_dtype=jnp.bfloat16):
    """One-time parameter prep (outside the hot path).

    w1: (hidden, d_in), b1: (hidden,), w2: (d_out, hidden), b2: (d_out,)
    PyTorch nn.Linear layout. Returns row-major (in, out) weights in
    `compute_dtype` and f32 row-vector biases.
    """
    w1t = jnp.asarray(w1).T.astype(compute_dtype)            # (d_in, hidden)
    w2t = jnp.asarray(w2).T.astype(compute_dtype)            # (hidden, d_out)
    b1r = jnp.asarray(b1).reshape(1, -1).astype(jnp.float32)  # (1, hidden)
    b2r = jnp.asarray(b2).reshape(1, -1).astype(jnp.float32)  # (1, d_out)
    return w1t, b1r, w2t, b2r


def _round_up(v, m):
    return ((v + m - 1) // m) * m


def _pick_row_tile(m, block_m):
    if m > block_m:
        return block_m
    if m >= 16:
        # At least 2 grid steps on the parallel axis -> both v7x TCs get work.
        return min(block_m, _round_up((m + 1) // 2, 8))
    return m


def _pick_hidden_tile(hidden, block_h, align=128):
    if hidden <= block_h:
        return hidden
    t = (block_h // align) * align
    while t >= align:
        if hidden % t == 0:      # exact tiling: no garbage in the reduction
            return t
        t -= align
    return hidden                # no clean divisor; keep hidden un-tiled


def position_wise_ffn(x, params, *, block_m=512, block_h=512):
    """Equivalent of PositionWiseFFN.forward(x); params from prepare_ffn_params."""
    w1t, b1r, w2t, b2r = params
    d_in, hidden = w1t.shape
    hidden2, d_out = w2t.shape
    assert hidden2 == hidden
    assert x.shape[-1] == d_in

    out_dtype = x.dtype
    lead_shape = x.shape[:-1]
    M = int(math.prod(lead_shape)) if lead_shape else 1
    x2 = x.reshape(M, d_in).astype(w1t.dtype)   # bf16 MXU operand

    tm = _pick_row_tile(M, block_m)
    th = _pick_hidden_tile(hidden, block_h)
    grid = (pl.cdiv(M, tm), pl.cdiv(hidden, th))

    w_isz = jnp.dtype(w1t.dtype).itemsize
    x_isz = jnp.dtype(x2.dtype).itemsize
    o_isz = jnp.dtype(out_dtype).itemsize

    # VMEM footprint of one grid step (double-buffered tiles + scratch + h).
    vmem_est = (
        2 * tm * d_in * x_isz           # x tile
        + 2 * d_in * th * w_isz         # W1 tile
        + 2 * 8 * max(th, 128) * 4      # b1 tile (padded)
        + 2 * th * d_out * w_isz        # W2 tile
        + 2 * 8 * max(d_out, 128) * 4   # b2 tile (padded)
        + 2 * tm * max(d_out, 128) * o_isz  # out tile
        + tm * max(d_out, 128) * 4      # f32 accumulator scratch
        + tm * max(th, 128) * 4         # live intermediate h
    )
    vmem_limit = int(min(64 << 20, max(16 << 20, 1.5 * vmem_est)))

    flops = 2 * M * hidden * (d_in + d_out)
    bytes_accessed = (M * d_in * x_isz + d_in * hidden * w_isz
                      + hidden * 4 + hidden * d_out * w_isz + d_out * 4
                      + M * d_out * o_isz)

    out2 = pl.pallas_call(
        _ffn_kernel,
        out_shape=jax.ShapeDtypeStruct((M, d_out), out_dtype),
        grid=grid,
        in_specs=[
            pl.BlockSpec((tm, d_in), lambda i, k: (i, 0)),
            pl.BlockSpec((d_in, th), lambda i, k: (0, k)),
            pl.BlockSpec((1, th), lambda i, k: (0, k)),
            pl.BlockSpec((th, d_out), lambda i, k: (k, 0)),
            pl.BlockSpec((1, d_out), lambda i, k: (0, 0)),
        ],
        out_specs=pl.BlockSpec((tm, d_out), lambda i, k: (i, 0)),
        scratch_shapes=[pltpu.VMEM((tm, d_out), jnp.float32)],
        compiler_params=pltpu.CompilerParams(
            dimension_semantics=("parallel", "arbitrary"),
            vmem_limit_bytes=vmem_limit),
        cost_estimate=pl.CostEstimate(
            flops=flops, transcendentals=0, bytes_accessed=bytes_accessed),
    )(x2, w1t, b1r, w2t, b2r)

    return out2.reshape(*lead_shape, d_out)


if __name__ == "__main__":
    # Small shapes consistent with the module: batch=2, seq=8,
    # input_size=32, fft_hidden_size=64, output_size=32.
    key = jax.random.PRNGKey(0)
    kx, k1, k2, k3, k4 = jax.random.split(key, 5)

    B, S = 2, 8
    D_IN, H, D_OUT = 32, 64, 32

    x = jax.random.normal(kx, (B, S, D_IN), dtype=jnp.float32)
    # PyTorch nn.Linear layout: weight (out, in), bias (out,)
    w1 = jax.random.normal(k1, (H, D_IN), dtype=jnp.float32) * 0.1
    b1 = jax.random.normal(k2, (H,), dtype=jnp.float32) * 0.1
    w2 = jax.random.normal(k3, (D_OUT, H), dtype=jnp.float32) * 0.1
    b2 = jax.random.normal(k4, (D_OUT,), dtype=jnp.float32) * 0.1

    # One-time prep: transpose to (in, out) and cast weights to bf16.
    params = prepare_ffn_params(w1, b1, w2, b2)

    out = position_wise_ffn(x, params)
    out = jax.block_until_ready(out)

    # Plain-JAX reference mirroring FFN2(relu(FFN1(X))) in f32.
    ref = jnp.maximum(x @ w1.T + b1, 0.0) @ w2.T + b2

    assert out.shape == (B, S, D_OUT)
    # bf16 operands with f32 accumulation -> looser tolerance than pure f32.
    assert jnp.allclose(out, ref, atol=2e-2, rtol=2e-2), float(
        jnp.max(jnp.abs(out - ref)))
    print("KERNEL_OK")
</pallas_src>

<mosaic_0001>
module attributes {stable_mosaic.version = 11 : i64} {
  func.func @_ffn_kernel(%arg0: i32, %arg1: i32, %arg2: memref<8x32xbf16, #tpu.memory_space<vmem>>, %arg3: memref<32x64xbf16, #tpu.memory_space<vmem>>, %arg4: memref<1x64xf32, #tpu.memory_space<vmem>>, %arg5: memref<64x32xbf16, #tpu.memory_space<vmem>>, %arg6: memref<1x32xf32, #tpu.memory_space<vmem>>, %arg7: memref<8x32xf32, #tpu.memory_space<vmem>>, %arg8: memref<8x32xf32, #tpu.memory_space<vmem>>) attributes {dimension_semantics = [#tpu.dimension_semantics<parallel>, #tpu.dimension_semantics<arbitrary>], iteration_bounds = array<i64: 2, 1>, scalar_prefetch = 0 : i64, scratch_operands = 1 : i64, tpu.core_type = #tpu.core_type<tc>, window_params = [{transform_indices = @transform_0, window_bounds = array<i64: 8, 32>}, {transform_indices = @transform_1, window_bounds = array<i64: 32, 64>}, {transform_indices = @transform_2, window_bounds = array<i64: 1, 64>}, {transform_indices = @transform_3, window_bounds = array<i64: 64, 32>}, {pipeline_mode = #tpu.pipeline_mode<synchronous>, transform_indices = @transform_4, window_bounds = array<i64: 1, 32>}, {transform_indices = @transform_5, window_bounds = array<i64: 8, 32>}]} {
    %c0_i32 = arith.constant 0 : i32
    %0 = arith.cmpi eq, %arg1, %c0_i32 : i32
    %1 = arith.extui %0 : i1 to i32
    %c0_i32_0 = arith.constant 0 : i32
    %2 = arith.cmpi ne, %1, %c0_i32_0 : i32
    scf.if %2 {
      %cst_16 = arith.constant 0.000000e+00 : f32
      %20 = vector.broadcast %cst_16 : f32 to vector<8x32xf32>
      %c0_17 = arith.constant 0 : index
      %c0_18 = arith.constant 0 : index
      %21 = vector.load %arg8[%c0_17, %c0_18] : memref<8x32xf32, #tpu.memory_space<vmem>>, vector<8x32xf32>
      tpu.vector_store %arg8[%c0_17, %c0_18], %20 {strides = array<i32>} : memref<8x32xf32, #tpu.memory_space<vmem>>, vector<8x32xf32>,
    } else {
    }
    %c0 = arith.constant 0 : index
    %c0_1 = arith.constant 0 : index
    %3 = vector.load %arg2[%c0, %c0_1] : memref<8x32xbf16, #tpu.memory_space<vmem>>, vector<8x32xbf16>
    %c0_2 = arith.constant 0 : index
    %c0_3 = arith.constant 0 : index
    %4 = vector.load %arg3[%c0_2, %c0_3] : memref<32x64xbf16, #tpu.memory_space<vmem>>, vector<32x64xbf16>
    %cst = arith.constant dense<0.000000e+00> : vector<8x64xf32>
    %5 = tpu.matmul %3, %4, %cst {dimension_numbers = #tpu.dot_dimension_numbers<[1], [0], [0], [1], [0, 0, 1, 1], [], []>} : vector<8x32xbf16>, vector<32x64xbf16>, vector<8x64xf32> -> vector<8x64xf32>
    %c0_4 = arith.constant 0 : index
    %c0_5 = arith.constant 0 : index
    %6 = vector.load %arg4[%c0_4, %c0_5] : memref<1x64xf32, #tpu.memory_space<vmem>>, vector<1x64xf32>
    %7 = vector.broadcast %6 : vector<1x64xf32> to vector<8x64xf32>
    %8 = arith.addf %5, %7 : vector<8x64xf32>
    %cst_6 = arith.constant 0.000000e+00 : f32
    %9 = vector.broadcast %cst_6 : f32 to vector<8x64xf32>
    %10 = arith.maximumf %8, %9 : vector<8x64xf32>
    %c0_7 = arith.constant 0 : index
    %c0_8 = arith.constant 0 : index
    %11 = vector.load %arg8[%c0_7, %c0_8] : memref<8x32xf32, #tpu.memory_space<vmem>>, vector<8x32xf32>
    %12 = arith.truncf %10 : vector<8x64xf32> to vector<8x64xbf16>
    %c0_9 = arith.constant 0 : index
    %c0_10 = arith.constant 0 : index
    %13 = vector.load %arg5[%c0_9, %c0_10] : memref<64x32xbf16, #tpu.memory_space<vmem>>, vector<64x32xbf16>
    %cst_11 = arith.constant dense<0.000000e+00> : vector<8x32xf32>
    %14 = tpu.matmul %12, %13, %cst_11 {dimension_numbers = #tpu.dot_dimension_numbers<[1], [0], [0], [1], [0, 0, 1, 1], [], []>} : vector<8x64xbf16>, vector<64x32xbf16>, vector<8x32xf32> -> vector<8x32xf32>
    %15 = arith.addf %11, %14 : vector<8x32xf32>
    %c0_12 = arith.constant 0 : index
    %c0_13 = arith.constant 0 : index
    %16 = vector.load %arg8[%c0_12, %c0_13] : memref<8x32xf32, #tpu.memory_space<vmem>>, vector<8x32xf32>
    tpu.vector_store %arg8[%c0_12, %c0_13], %15 {strides = array<i32>} : memref<8x32xf32, #tpu.memory_space<vmem>>, vector<8x32xf32>,
    %c0_i32_14 = arith.constant 0 : i32
    %17 = arith.cmpi eq, %arg1, %c0_i32_14 : i32
    %18 = arith.extui %17 : i1 to i32
    %c0_i32_15 = arith.constant 0 : i32
    %19 = arith.cmpi ne, %18, %c0_i32_15 : i32
    scf.if %19 {
      %c0_16 = arith.constant 0 : index
      %c0_17 = arith.constant 0 : index
      %20 = vector.load %arg8[%c0_16, %c0_17] : memref<8x32xf32, #tpu.memory_space<vmem>>, vector<8x32xf32>
      %c0_18 = arith.constant 0 : index
      %c0_19 = arith.constant 0 : index
      %21 = vector.load %arg6[%c0_18, %c0_19] : memref<1x32xf32, #tpu.memory_space<vmem>>, vector<1x32xf32>
      %22 = vector.broadcast %21 : vector<1x32xf32> to vector<8x32xf32>
      %23 = arith.addf %20, %22 : vector<8x32xf32>
      %c0_20 = arith.constant 0 : index
      %c0_21 = arith.constant 0 : index
      %24 = vector.load %arg7[%c0_20, %c0_21] : memref<8x32xf32, #tpu.memory_space<vmem>>, vector<8x32xf32>
      tpu.vector_store %arg7[%c0_20, %c0_21], %23 {strides = array<i32>} : memref<8x32xf32, #tpu.memory_space<vmem>>, vector<8x32xf32>,
    } else {
    }
    return
  }
  func.func @transform_0(%arg0: i32, %arg1: i32) -> (i32, i32) {
    %c0_i32 = arith.constant 0 : i32
    %c0_i32_0 = arith.constant 0 : i32
    return %arg0, %c0_i32 : i32, i32
  }
  func.func @transform_1(%arg0: i32, %arg1: i32) -> (i32, i32) {
    %c0_i32 = arith.constant 0 : i32
    %c0_i32_0 = arith.constant 0 : i32
    return %c0_i32, %arg1 : i32, i32
  }
  func.func @transform_2(%arg0: i32, %arg1: i32) -> (i32, i32) {
    %c0_i32 = arith.constant 0 : i32
    %c0_i32_0 = arith.constant 0 : i32
    return %c0_i32, %arg1 : i32, i32
  }
  func.func @transform_3(%arg0: i32, %arg1: i32) -> (i32, i32) {
    %c0_i32 = arith.constant 0 : i32
    %c0_i32_0 = arith.constant 0 : i32
    return %arg1, %c0_i32 : i32, i32
  }
  func.func @transform_4(%arg0: i32, %arg1: i32) -> (i32, i32) {
    %c0_i32 = arith.constant 0 : i32
    %c0_i32_0 = arith.constant 0 : i32
    %c0_i32_1 = arith.constant 0 : i32
    return %c0_i32, %c0_i32_0 : i32, i32
  }
  func.func @transform_5(%arg0: i32, %arg1: i32) -> (i32, i32) {
    %c0_i32 = arith.constant 0 : i32
    %c0_i32_0 = arith.constant 0 : i32
    return %arg0, %c0_i32 : i32, i32
  }
}

</mosaic_0001>

<llo_original>
// kernel: tpu_custom_call.1
$region0: #{tpu_custom_call.1}
  #allocation0 [shape = 'u32[]', space=smem, size = 0x4, offset = 0x4, fixed_abs, tag = 'smem constant byte address 0x4 - core index']
  #allocation1 [shape = 'u32[144,128]{1,0:T(1,128)}', space=vmem, size = 0x12000, scoped, tag = 'internal scratch']
  #allocation2 [shape = 'f32[8,32]{1,0:T(8,128)}', space=vmem, size = 0x1000, scoped, tag = 'scratch operand']
  %s0 = inlined_call_operand.vmem [shape: bf16[16,32], index: 0, kind: input, shape index: {}]
  %s1 = inlined_call_operand.vmem [shape: bf16[32,64], index: 1, kind: input, shape index: {}]
  %s2 = inlined_call_operand.vmem [shape: f32[1,64], index: 2, kind: input, shape index: {}]
  %s3 = inlined_call_operand.vmem [shape: bf16[64,32], index: 3, kind: input, shape index: {}]
  %s4 = inlined_call_operand.vmem [shape: f32[1,32], index: 4, kind: input, shape index: {}]
  %s5 = inlined_call_operand.hbm [shape: f32[16,32], index: 5, kind: output, shape index: {}]
  %s6 = sld [smem:[#allocation0]]
  $region61: #{tpu_custom_call.1} parent=0
    _
  %s8 = ssub.s32 1, %s6
  %s9 = scalar_select 0, %s8, %s6
  $region1: #{tpu_custom_call.1} parent=0
    #allocation3 [shape = 'u8[8192]{0}', space=vmem, size = 0x2000, scoped, tag = 'output window, operand 0']
    #allocation4 [shape = 's32[2]{0}', space=sflag, size = 0x8, scoped, tag = 'scoped memory for tpu_custom_call.1']
    %10 = vsyncpa [#allocation4], 0
    %s11 = scalar_lea.sflag [#allocation4], 1
    %12 = vsyncpa %s11, 0
    loop: start=0, step=1, limit=4
    $region2: #{tpu_custom_call.1} parent=1 // loop_pre_header
      _
    $region3: #{tpu_custom_call.1} parent=1 // loop_header
      %s14 = sphi 0, %s18
      %p15 = scmp.ge.s32.totalorder %s14, 4
      %s21 = sphi 0, %s33
      %s22 = sphi 0, %s29
      %s23 = sphi 0, %s21
      %s24 = sphi 0, %s22
      %s25 = sphi 0, %s23
      %s26 = sphi 0, %s24
      %s36 = sphi 0, %s38
      %s39 = sphi 0, %s36
      %s40 = sphi 0, %s39
      %s56 = sphi 0, %s40
      %s62 = sphi 0, %s64
      %s65 = sphi 0, %s62
      %s66 = sphi 0, %s65
      %s82 = sphi 0, %s66
      %s88 = sphi 0, %s90
      %s91 = sphi 0, %s88
      %s92 = sphi 0, %s91
      %s108 = sphi 0, %s92
      %s114 = sphi 0, %s116
      %s117 = sphi 0, %s114
      %s118 = sphi 0, %s117
      %s134 = sphi 0, %s118
      %s138 = sphi 0, %s138
      %s140 = sphi 0, %s138
      %s141 = sphi 0, %s140
      %s155 = sphi 0, %s141
      %s161 = sphi 0, %s163
      %s164 = sphi 0, %s161
      %s165 = sphi 0, %s164
      %s181 = sphi 0, %s165
    $region4: #{tpu_custom_call.1} parent=1 // loop_header_branch
      %17 = sbr.rel (%p15) target = $region8
    $region5: #{tpu_custom_call.1} parent=1 // loop_body
      %s19 = ssub.s32 %s14, 1
      %s20 = ssub.s32 %s14, 2
      %s27 = sadd.s32 1, %s22
      %p28 = scmp.ge.s32.totalorder %s27, 1
      %s29 = scalar_select %p28, 0, %s27
      %s30 = sadd.s32 1, %s21
      %s31 = scalar_select %p28, %s30, %s21
      %p32 = scmp.ge.s32.totalorder %s31, 2
      %s33 = scalar_select %p32, 0, %s31
      %s34 = ssub.s32 %s21, %s33
      %p35 = scmp.eq.s32.totalorder %s34, 0
      %s37 = sadd.s32 %s36, 1
      %s38 = scalar_select %p35, %s36, %s37
      %p41 = pneg %p35
      %p42 = scmp.eq.s32.totalorder %s14, 1
      %p43 = por %p41, %p42
      %p44 = scmp.ne.s32.totalorder %s36, %s39
      %p45 = scmp.eq.s32.totalorder %s14, 0
      %p46 = por %p44, %p45
      %p47 = scmp.ne.s32.totalorder %s36, %s39
      %p48 = scmp.eq.s32.totalorder %s19, 1
      %p49 = por %p47, %p48
      %p50 = scmp.ne.s32.totalorder %s39, %s40
      %p51 = scmp.eq.s32.totalorder %s19, 0
      %p52 = por %p50, %p51
      %p53 = scmp.ne.s32.totalorder %s39, %s40
      %p54 = scmp.eq.s32.totalorder %s20, 1
      %p55 = por %p53, %p54
      %p57 = scmp.ne.s32.totalorder %s40, %s56
      %p58 = scmp.eq.s32.totalorder %s20, 0
      %p59 = por %p57, %p58
      %s60 = ssub.s32 %s22, %s29
      %p61 = scmp.eq.s32.totalorder %s60, 0
      %s63 = sadd.s32 %s62, 1
      %s64 = scalar_select %p61, %s62, %s63
      %p67 = pneg %p61
      %p68 = scmp.eq.s32.totalorder %s14, 1
      %p69 = por %p67, %p68
      %p70 = scmp.ne.s32.totalorder %s62, %s65
      %p71 = scmp.eq.s32.totalorder %s14, 0
      %p72 = por %p70, %p71
      %p73 = scmp.ne.s32.totalorder %s62, %s65
      %p74 = scmp.eq.s32.totalorder %s19, 1
      %p75 = por %p73, %p74
      %p76 = scmp.ne.s32.totalorder %s65, %s66
      %p77 = scmp.eq.s32.totalorder %s19, 0
      %p78 = por %p76, %p77
      %p79 = scmp.ne.s32.totalorder %s65, %s66
      %p80 = scmp.eq.s32.totalorder %s20, 1
      %p81 = por %p79, %p80
      %p83 = scmp.ne.s32.totalorder %s66, %s82
      %p84 = scmp.eq.s32.totalorder %s20, 0
      %p85 = por %p83, %p84
      %s86 = ssub.s32 %s22, %s29
      %p87 = scmp.eq.s32.totalorder %s86, 0
      %s89 = sadd.s32 %s88, 1
      %s90 = scalar_select %p87, %s88, %s89
      %p93 = pneg %p87
      %p94 = scmp.eq.s32.totalorder %s14, 1
      %p95 = por %p93, %p94
      %p96 = scmp.ne.s32.totalorder %s88, %s91
      %p97 = scmp.eq.s32.totalorder %s14, 0
      %p98 = por %p96, %p97
      %p99 = scmp.ne.s32.totalorder %s88, %s91
      %p100 = scmp.eq.s32.totalorder %s19, 1
      %p101 = por %p99, %p100
      %p102 = scmp.ne.s32.totalorder %s91, %s92
      %p103 = scmp.eq.s32.totalorder %s19, 0
      %p104 = por %p102, %p103
      %p105 = scmp.ne.s32.totalorder %s91, %s92
      %p106 = scmp.eq.s32.totalorder %s20, 1
      %p107 = por %p105, %p106
      %p109 = scmp.ne.s32.totalorder %s92, %s108
      %p110 = scmp.eq.s32.totalorder %s20, 0
      %p111 = por %p109, %p110
      %s112 = ssub.s32 %s22, %s29
      %p113 = scmp.eq.s32.totalorder %s112, 0
      %s115 = sadd.s32 %s114, 1
      %s116 = scalar_select %p113, %s114, %s115
      %p119 = pneg %p113
      %p120 = scmp.eq.s32.totalorder %s14, 1
      %p121 = por %p119, %p120
      %p122 = scmp.ne.s32.totalorder %s114, %s117
      %p123 = scmp.eq.s32.totalorder %s14, 0
      %p124 = por %p122, %p123
      %p125 = scmp.ne.s32.totalorder %s114, %s117
      %p126 = scmp.eq.s32.totalorder %s19, 1
      %p127 = por %p125, %p126
      %p128 = scmp.ne.s32.totalorder %s117, %s118
      %p129 = scmp.eq.s32.totalorder %s19, 0
      %p130 = por %p128, %p129
      %p131 = scmp.ne.s32.totalorder %s117, %s118
      %p132 = scmp.eq.s32.totalorder %s20, 1
      %p133 = por %p131, %p132
      %p135 = scmp.ne.s32.totalorder %s118, %s134
      %p136 = scmp.eq.s32.totalorder %s20, 0
      %p137 = por %p135, %p136
      %s139 = sadd.s32 %s138, 1
      %p142 = scmp.eq.s32.totalorder %s14, 1
      %p143 = scmp.ne.s32.totalorder %s138, %s140
      %p144 = scmp.eq.s32.totalorder %s14, 0
      %p145 = por %p143, %p144
      %p146 = scmp.ne.s32.totalorder %s138, %s140
      %p147 = scmp.eq.s32.totalorder %s19, 1
      %p148 = por %p146, %p147
      %p149 = scmp.ne.s32.totalorder %s140, %s141
      %p150 = scmp.eq.s32.totalorder %s19, 0
      %p151 = por %p149, %p150
      %p152 = scmp.ne.s32.totalorder %s140, %s141
      %p153 = scmp.eq.s32.totalorder %s20, 1
      %p154 = por %p152, %p153
      %p156 = scmp.ne.s32.totalorder %s141, %s155
      %p157 = scmp.eq.s32.totalorder %s20, 0
      %p158 = por %p156, %p157
      %s159 = ssub.s32 %s21, %s33
      %p160 = scmp.eq.s32.totalorder %s159, 0
      %s162 = sadd.s32 %s161, 1
      %s163 = scalar_select %p160, %s161, %s162
      %p166 = pneg %p160
      %p167 = scmp.eq.s32.totalorder %s14, 1
      %p168 = por %p166, %p167
      %p169 = scmp.ne.s32.totalorder %s161, %s164
      %p170 = scmp.eq.s32.totalorder %s14, 0
      %p171 = por %p169, %p170
      %p172 = scmp.ne.s32.totalorder %s161, %s164
      %p173 = scmp.eq.s32.totalorder %s19, 1
      %p174 = por %p172, %p173
      %p175 = scmp.ne.s32.totalorder %s164, %s165
      %p176 = scmp.eq.s32.totalorder %s19, 0
      %p177 = por %p175, %p176
      %p178 = scmp.ne.s32.totalorder %s164, %s165
      %p179 = scmp.eq.s32.totalorder %s20, 1
      %p180 = por %p178, %p179
      %p182 = scmp.ne.s32.totalorder %s165, %s181
      %p183 = scmp.eq.s32.totalorder %s20, 0
      %p184 = por %p182, %p183
      %p185 = scmp.le.s32.totalorder 1, %s14
      %p186 = scmp.lt.s32.totalorder %s14, 3
      %p187 = pnand %p185, %p186
      %p188 = pneg %p187
      // Predicated region
      $region9: #{tpu_custom_call.1} parent=5 // pred_check
        _
      $region10: #{tpu_custom_call.1} parent=5 // pred_check_branch
        %190 = sbr.rel (%p187) target = $region12
      $region11: #{tpu_custom_call.1} parent=5 // pred_region
        %s191 = ssub.s32 %s14, 1
        // Predicated region
        $region13: #{tpu_custom_call.1} parent=11 // pred_check
          %p192 = pneg %p78
        $region14: #{tpu_custom_call.1} parent=11 // pred_check_branch
          %194 = sbr.rel (%p192) target = $region16
        $region15: #{tpu_custom_call.1} parent=11 // pred_region
          %p195 = scmp.lt.s32.totalorder %s24, 0
          %s196 = scalar_select %p195, %s24, 0
          %s197 = smul.addr %s196, 4
          %s198 = scalar_lea.vmem %s1, %s197
        $region16: #{tpu_custom_call.1} parent=11 // pred_fallthru
          _
        // Predicated region
        $region17: #{tpu_custom_call.1} parent=11 // pred_check
          %p199 = pneg %p104
        $region18: #{tpu_custom_call.1} parent=11 // pred_check_branch
          %201 = sbr.rel (%p199) target = $region20
        $region19: #{tpu_custom_call.1} parent=11 // pred_region
          %p202 = scmp.lt.s32.totalorder %s24, 0
          %s203 = scalar_select %p202, %s24, 0
          %s204 = scalar_lea.vmem %s2, %s203
        $region20: #{tpu_custom_call.1} parent=11 // pred_fallthru
          _
        // Predicated region
        $region21: #{tpu_custom_call.1} parent=11 // pred_check
          %p205 = pneg %p130
        $region22: #{tpu_custom_call.1} parent=11 // pred_check_branch
          %207 = sbr.rel (%p205) target = $region24
        $region23: #{tpu_custom_call.1} parent=11 // pred_region
          %s208 = smul.u32 8, %s24
          %p209 = scmp.lt.s32.totalorder %s208, 7
          %s210 = scalar_select %p209, %s208, 7
          %s211 = smul.addr %s210, 4
          %s212 = scalar_lea.vmem %s3, %s211
          %s213 = smul.u32 8, %s24
        $region24: #{tpu_custom_call.1} parent=11 // pred_fallthru
          _
        // Predicated region
        $region25: #{tpu_custom_call.1} parent=11 // pred_check
          %p214 = pneg %p151
        $region26: #{tpu_custom_call.1} parent=11 // pred_check_branch
          %216 = sbr.rel (%p214) target = $region28
        $region27: #{tpu_custom_call.1} parent=11 // pred_region
          _
        $region28: #{tpu_custom_call.1} parent=11 // pred_fallthru
          _
      $region12: #{tpu_custom_call.1} parent=5 // pred_fallthru
        _
      %p217 = scmp.lt.s32.totalorder %s14, 2
      // Predicated region
      $region29: #{tpu_custom_call.1} parent=5 // pred_check
        %p218 = pneg %p217
      $region30: #{tpu_custom_call.1} parent=5 // pred_check_branch
        %220 = sbr.rel (%p218) target = $region32
      $region31: #{tpu_custom_call.1} parent=5 // pred_region
        // Predicated region
        $region33: #{tpu_custom_call.1} parent=31 // pred_check
          %p221 = pneg %p46
        $region34: #{tpu_custom_call.1} parent=31 // pred_check_branch
          %223 = sbr.rel (%p221) target = $region36
        $region35: #{tpu_custom_call.1} parent=31 // pred_region
          %p224 = scmp.lt.s32.totalorder %s21, 1
          %s225 = scalar_select %p224, %s21, 1
          %s226 = smul.addr %s225, 4
          %s227 = scalar_lea.vmem %s0, %s226
        $region36: #{tpu_custom_call.1} parent=31 // pred_fallthru
          _
      $region32: #{tpu_custom_call.1} parent=5 // pred_fallthru
        _
      %p228 = scmp.le.s32.totalorder 1, %s14
      %p229 = scmp.lt.s32.totalorder %s14, 3
      %p230 = pnand %p228, %p229
      %p231 = pneg %p230
      // Predicated region
      $region37: #{tpu_custom_call.1} parent=5 // pred_check
        _
      $region38: #{tpu_custom_call.1} parent=5 // pred_check_branch
        %233 = sbr.rel (%p230) target = $region40
      $region39: #{tpu_custom_call.1} parent=5 // pred_region
        %s234 = ssub.s32 %s14, 1
        %p235 = scmp.lt.s32.totalorder %s23, 1
        %s236 = scalar_select %p235, %s23, 1
        %s237 = smul.addr %s236, 4
        %s238 = scalar_lea.vmem %s0, %s237
        %p239 = pneg %p52
        %p240 = pneg %p49
        %p241 = scmp.lt.s32.totalorder %s24, 0
        %s242 = scalar_select %p241, %s24, 0
        %s243 = smul.addr %s242, 4
        %s244 = scalar_lea.vmem %s1, %s243
        %p245 = pneg %p78
        %p246 = pneg %p75
        %p247 = scmp.lt.s32.totalorder %s24, 0
        %s248 = scalar_select %p247, %s24, 0
        %s249 = scalar_lea.vmem %s2, %s248
        %p250 = pneg %p104
        %p251 = pneg %p101
        %s252 = smul.u32 8, %s24
        %p253 = scmp.lt.s32.totalorder %s252, 7
        %s254 = scalar_select %p253, %s252, 7
        %s255 = smul.addr %s254, 4
        %s256 = scalar_lea.vmem %s3, %s255
        %p257 = pneg %p130
        %p258 = pneg %p127
        %p259 = pneg %p151
        %p260 = pneg %p148
        %p261 = pneg %p177
        %p262 = pneg %p174
        %s263 = sand.u32 %s164, 1
        %s264 = scalar_lea.sflag [#allocation4], %s263
        %s265 = sand.u32 %s164, 1
        %s266 = smul.addr %s265, 8
        %s267 = scalar_lea.vmem [#allocation3], %s266
        %p268 = scmp.lt.s32.totalorder %s23, 1
        %s269 = scalar_select %p268, %s23, 1
        %s270 = smul.addr %s269, 4
        %s271 = scalar_lea.vmem %s0, %s270
        %p272 = scmp.lt.s32.totalorder %s24, 0
        %s273 = scalar_select %p272, %s24, 0
        %s274 = smul.addr %s273, 4
        %s275 = scalar_lea.vmem %s1, %s274
        %p276 = scmp.lt.s32.totalorder %s24, 0
        %s277 = scalar_select %p276, %s24, 0
        %s278 = scalar_lea.vmem %s2, %s277
        %s279 = smul.u32 8, %s24
        %p280 = scmp.lt.s32.totalorder %s279, 7
        %s281 = scalar_select %p280, %s279, 7
        %s282 = smul.addr %s281, 4
        %s283 = scalar_lea.vmem %s3, %s282
        %s284 = smul.u32 8, %s24
        %p286 = scmp.eq.s32.totalorder %s24, 0
        // Predicated region
        $region41: #{tpu_custom_call.1} parent=39 // pred_check
          %p287 = pneg %p286
        $region42: #{tpu_custom_call.1} parent=39 // pred_check_branch
          %289 = sbr.rel (%p287) target = $region44
        $region43: #{tpu_custom_call.1} parent=39 // pred_region
          %vm290 = vcmask 261120
          %291 = vst.msk [vmem:[#allocation2] sm:$0xff] %vm290, 0.0
        $region44: #{tpu_custom_call.1} parent=39 // pred_fallthru
          _
        %v292 = vld [vmem:[%s271] sm:$0xf]
        %v293 = vld [vmem:[%s275] sm:$0xf]
        %v294 = vld [vmem:[%s275 + $0x4] sm:$0xf]
        %v295 = vld [vmem:[%s275 + $0x8] sm:$0xf]
        %v296 = vld [vmem:[%s275 + $0xc] sm:$0xf]
        %v297 = vld [vmem:[%s278] sm:$0x1]
        %v299 = vlaneseq
        %v300 = vshrl.u32 %v299, 7
        %v301 = vsub.s32 0, %v300
        %v302 = vrot.slane %v297, %v301
        %v308 = vunpack.c.l.b16 %v293
        %v309 = vunpack.c.l.b16 %v294
        %v310 = vunpack.c.l.b16 %v295
        %v311 = vunpack.c.l.b16 %v296
        %v312 = vpack.c.b16 %v309, %v308
        %v313 = vpack.c.b16 %v311, %v310
        %vm316 = vcmask 261120
        %v318 = vsel %vm316, %v292, 0
        %320 = vmatprep.subr.bf16.mxu0 0
        %321 = vmatpush1.bf16.msra.mxu0 %v312
        %322 = vmatprep.subr.bf16.mxu0 0
        %323 = vmatpush1.bf16.msra.mxu0 %v313
        %324 = vmatprep.subr.bf16.mxu0 0
        %325 = vmatpush1.bf16.msra.mxu0 0
        %326 = vmatprep.subr.bf16.mxu0 0
        %327 = vmatpush1.bf16.msra.mxu0 0
        %328 = vmatprep.subr.bf16.mxu0 0
        %329 = vmatpush1.bf16.msra.mxu0 0
        %330 = vmatprep.subr.bf16.mxu0 0
        %331 = vmatpush1.bf16.msra.mxu0 0
        %332 = vmatprep.subr.bf16.mxu0 0
        %333 = vmatpush1.bf16.msra.mxu0 0
        %334 = vmatprep.subr.bf16.mxu0 0
        %335 = vmatpush1.bf16.msra.mxu0 0
        %336 = vmatprep.subr.bf16.mxu0 0
        %337 = vmatpush1.bf16.msra.mxu0 0
        %338 = vmatprep.subr.bf16.mxu0 0
        %339 = vmatpush1.bf16.msra.mxu0 0
        %340 = vmatprep.subr.bf16.mxu0 0
        %341 = vmatpush1.bf16.msra.mxu0 0
        %342 = vmatprep.subr.bf16.mxu0 0
        %343 = vmatpush1.bf16.msra.mxu0 0
        %344 = vmatprep.subr.bf16.mxu0 0
        %345 = vmatpush1.bf16.msra.mxu0 0
        %346 = vmatprep.subr.bf16.mxu0 0
        %347 = vmatpush1.bf16.msra.mxu0 0
        %348 = vmatprep.subr.bf16.mxu0 0
        %349 = vmatpush1.bf16.msra.mxu0 0
        %350 = vmatprep.subr.bf16.mxu0 0
        %351 = vmatpush1.bf16.msra.mxu0 0
        %352 = vmatprep.mubr.bf16.mxu0 0
        %353 = vmatmul.mubr.bf16.gmra.mrb[0].mxu0 %v318
        %v354 = vpop.f32.mrb[0].mxu0
        %v355 = vadd.f32 %v302, %v354
        %v356 = vpop.f32.mrb[0].mxu0
        %v357 = vpop.f32.mrb[0].mxu0
        %v358 = vpop.f32.mrb[0].mxu0
        %359 = vdwg.mxu0
        %v360 = vmax.f32 %v355, 0.0
        %v361 = vld [vmem:[#allocation2] sm:$0xff]
        %v362 = vpack.c.bf16 %v360, %v360
        %v363 = vld [vmem:[%s283] sm:$0xf]
        %v364 = vld [vmem:[%s283 + $0x4] sm:$0xf]
        %v365 = vld [vmem:[%s283 + $0x8] sm:$0xf]
        %v366 = vld [vmem:[%s283 + $0xc] sm:$0xf]
        %v367 = vld [vmem:[%s283 + $0x10] sm:$0xf]
        %v368 = vld [vmem:[%s283 + $0x14] sm:$0xf]
        %v369 = vld [vmem:[%s283 + $0x18] sm:$0xf]
        %v370 = vld [vmem:[%s283 + $0x1c] sm:$0xf]
        %v379 = vunpack.c.l.b16 %v363
        %v380 = vunpack.c.l.b16 %v364
        %v381 = vunpack.c.l.b16 %v365
        %v382 = vunpack.c.l.b16 %v366
        %v383 = vunpack.c.l.b16 %v367
        %v384 = vunpack.c.l.b16 %v368
        %v385 = vunpack.c.l.b16 %v369
        %v386 = vunpack.c.l.b16 %v370
        %v387 = vpack.c.b16 %v380, %v379
        %v388 = vpack.c.b16 %v382, %v381
        %v389 = vpack.c.b16 %v384, %v383
        %v390 = vpack.c.b16 %v386, %v385
        %vm395 = vcmask 523264
        %v397 = vsel %vm395, %v362, 0
        %399 = vmatprep.subr.bf16.mxu0 0
        %400 = vmatpush1.bf16.msra.mxu0 %v387
        %401 = vmatprep.subr.bf16.mxu0 0
        %402 = vmatpush1.bf16.msra.mxu0 %v388
        %403 = vmatprep.subr.bf16.mxu0 0
        %404 = vmatpush1.bf16.msra.mxu0 %v389
        %405 = vmatprep.subr.bf16.mxu0 0
        %406 = vmatpush1.bf16.msra.mxu0 %v390
        %407 = vmatprep.subr.bf16.mxu0 0
        %408 = vmatpush1.bf16.msra.mxu0 0
        %409 = vmatprep.subr.bf16.mxu0 0
        %410 = vmatpush1.bf16.msra.mxu0 0
        %411 = vmatprep.subr.bf16.mxu0 0
        %412 = vmatpush1.bf16.msra.mxu0 0
        %413 = vmatprep.subr.bf16.mxu0 0
        %414 = vmatpush1.bf16.msra.mxu0 0
        %415 = vmatprep.subr.bf16.mxu0 0
        %416 = vmatpush1.bf16.msra.mxu0 0
        %417 = vmatprep.subr.bf16.mxu0 0
        %418 = vmatpush1.bf16.msra.mxu0 0
        %419 = vmatprep.subr.bf16.mxu0 0
        %420 = vmatpush1.bf16.msra.mxu0 0
        %421 = vmatprep.subr.bf16.mxu0 0
        %422 = vmatpush1.bf16.msra.mxu0 0
        %423 = vmatprep.subr.bf16.mxu0 0
        %424 = vmatpush1.bf16.msra.mxu0 0
        %425 = vmatprep.subr.bf16.mxu0 0
        %426 = vmatpush1.bf16.msra.mxu0 0
        %427 = vmatprep.subr.bf16.mxu0 0
        %428 = vmatpush1.bf16.msra.mxu0 0
        %429 = vmatprep.subr.bf16.mxu0 0
        %430 = vmatpush1.bf16.msra.mxu0 0
        %431 = vmatprep.mubr.bf16.mxu0 0
        %432 = vmatmul.mubr.bf16.gmra.mrb[0].mxu0 %v397
        %v433 = vpop.f32.mrb[0].mxu0
        %v434 = vadd.f32 0.0, %v433
        %v435 = vpop.f32.mrb[0].mxu0
        %v436 = vpop.f32.mrb[0].mxu0
        %v437 = vpop.f32.mrb[0].mxu0
        %438 = vdwg.mxu0
        %v439 = vadd.f32 %v361, %v434
        %440 = vst.msk [vmem:[#allocation2] sm:$0xff] %vm316, %v439
        // Predicated region
        $region45: #{tpu_custom_call.1} parent=39 // pred_check
          %p441 = pneg %p286
        $region46: #{tpu_custom_call.1} parent=39 // pred_check_branch
          %443 = sbr.rel (%p441) target = $region48
        $region47: #{tpu_custom_call.1} parent=39 // pred_region
          %v444 = vld [vmem:[#allocation2] sm:$0xff]
          %v445 = vld [vmem:[%s4] sm:$0x1]
          %v447 = vlaneseq
          %v448 = vshrl.u32 %v447, 7
          %v449 = vsub.s32 0, %v448
          %v450 = vrot.slane %v445, %v449
          %v452 = vadd.f32 %v444, %v450
          %453 = vst.msk [vmem:[%s267] sm:$0xff] %vm316, %v452
        $region48: #{tpu_custom_call.1} parent=39 // pred_fallthru
          _
        %s454 = sand.u32 %s164, 1
        %s455 = scalar_lea.sflag [#allocation4], %s454
        %s456 = sand.u32 %s164, 1
        %s457 = smul.addr %s456, 8
        %s458 = scalar_lea.vmem [#allocation3], %s457
        // Predicated region
        $region49: #{tpu_custom_call.1} parent=39 // pred_check
          %p459 = pneg %p174
        $region50: #{tpu_custom_call.1} parent=39 // pred_check_branch
          %461 = sbr.rel (%p459) target = $region52
        $region51: #{tpu_custom_call.1} parent=39 // pred_region
          %s463 = ssub.s32 128, 128
          %464 = vsyncadd %s455, %s463
          %s465 = smul.addr %s23, 128
          %s466 = scalar_lea.hbm %s5, %s465
          %s468 = sshll.u32 %s458, 4
          %s469 = int_to_ptr.vmem [resolvable:$true] %s468
          %471 = dma.vmem_to_hbm [thread:$0]  %s469, 128, %s466, %s455
        $region52: #{tpu_custom_call.1} parent=39 // pred_fallthru
          _
      $region40: #{tpu_custom_call.1} parent=5 // pred_fallthru
        _
      %p472 = scmp.le.s32.totalorder 2, %s14
      // Predicated region
      $region53: #{tpu_custom_call.1} parent=5 // pred_check
        %p473 = pneg %p472
      $region54: #{tpu_custom_call.1} parent=5 // pred_check_branch
        %475 = sbr.rel (%p473) target = $region56
      $region55: #{tpu_custom_call.1} parent=5 // pred_region
        %s476 = ssub.s32 %s14, 2
        // Predicated region
        $region57: #{tpu_custom_call.1} parent=55 // pred_check
          %p477 = pneg %p180
        $region58: #{tpu_custom_call.1} parent=55 // pred_check_branch
          %479 = sbr.rel (%p477) target = $region60
        $region59: #{tpu_custom_call.1} parent=55 // pred_region
          %s480 = sand.u32 %s165, 1
          %s481 = scalar_lea.sflag [#allocation4], %s480
          %s482 = sand.u32 %s165, 1
          %s483 = smul.addr %s482, 8
          %s484 = scalar_lea.vmem [#allocation3], %s483
          %485 = dma.done %s481, 128
        $region60: #{tpu_custom_call.1} parent=55 // pred_fallthru
          _
      $region56: #{tpu_custom_call.1} parent=5 // pred_fallthru
        _
    $region6: #{tpu_custom_call.1} parent=1 // loop_footer
      %s18 = sadd.s32 1, %s14
    $region7: #{tpu_custom_call.1} parent=1 // loop_footer_branch
      %13 = sbr.rel target = $region3
    $region8: #{tpu_custom_call.1} parent=1 // loop_exit
      _
    %486 = vsyncpa [#allocation4], 1
    %s487 = scalar_lea.sflag [#allocation4], 1
    %488 = vsyncpa %s487, 1

</llo_original>
